<compile_context>
chip_gen: v7x
topology: tpu7x:2x2x1
jax: 0.10.0
libtpu: 0.0.40
codegen_flags: <defaults>
</compile_context>

<pallas_src>
import math

import jax
import jax.numpy as jnp
from jax.experimental import pallas as pl
from jax.experimental.pallas import tpu as pltpu

_SHIFT = math.log(2.0)            # full-precision log(2)
_LANE = 128                       # TPU lane width
_COLS = 512                       # lane-dense slab width for flat fallbacks
_TARGET_BLOCK_BYTES = 8 << 20     # ~8 MiB per block (v6e/v7x sweet spot)
_MAX_BLOCK_BYTES = 8 << 20        # guard for pathologically wide trailing dims
_MIN_GRID_STEPS = 8               # keep >=8 steps on big inputs (v7x 2 TCs)
_VMEM_LIMIT = 48 * 1024 * 1024    # 2x(in+out) ~32 MiB + headroom, < v7x 64 MiB


def _shifted_softplus_kernel(beta_ref, x_ref, o_ref):
    # beta lives in SMEM as a (1, 1) scalar (learnable nn.Parameter)
    beta = beta_ref[0, 0]
    z = beta * x_ref[...].astype(jnp.float32)
    # numerically-stable softplus: max(z, 0) + log1p(exp(-|z|))
    sp = jnp.maximum(z, 0.0) + jnp.log1p(jnp.exp(-jnp.abs(z)))
    o_ref[...] = (sp - _SHIFT).astype(o_ref.dtype)


def _sublane_multiple(dtype):
    # f32 -> 8 sublanes per packed vreg row group; bf16/f16 -> 16; int8/fp8 -> 32
    itemsize = jnp.dtype(dtype).itemsize
    return {4: 8, 2: 16, 1: 32}.get(itemsize, 8)


def shifted_softplus(x, beta):
    """x: any-shape array; beta: scalar learnable parameter."""
    orig_shape = x.shape
    dtype = x.dtype
    total = x.size
    if total == 0:
        return x

    itemsize = jnp.dtype(dtype).itemsize
    sub = _sublane_multiple(dtype)
    last = orig_shape[-1] if x.ndim >= 1 else 1

    padded = False
    if last % _LANE == 0 and last > 0 and last * sub * itemsize <= _MAX_BLOCK_BYTES:
        # Fast path A: trailing dim already lane-dense -> collapse leading dims
        # (free reshape), no pad, no slice.
        cols = last
        rows = total // cols
        x2d = x.reshape(rows, cols)
    elif total % _COLS == 0:
        # Fast path B: flat size divides 512 -> free reshape to a wide slab.
        cols = _COLS
        rows = total // cols
        x2d = x.reshape(rows, cols)
    else:
        # Ragged fallback: pad flat data just enough to form a rectangle.
        # Pallas masks the partial last row-block, so no padding to tile
        # multiples is needed; the extra tail is sliced off on return.
        cols = _COLS
        rows = -(-total // cols)                       # ceil-div
        flat = x.reshape(-1)
        flat = jnp.pad(flat, (0, rows * cols - total))
        x2d = flat.reshape(rows, cols)
        padded = True

    # Row tile sized for ~_TARGET_BLOCK_BYTES, aligned to the sublane packing
    # granularity of this dtype; never smaller than one packed row group.
    tm = max(sub, (_TARGET_BLOCK_BYTES // (cols * itemsize)) // sub * sub)

    # v7x megacore: on large inputs cap tm so the parallel grid keeps at least
    # _MIN_GRID_STEPS steps to shard across both TensorCores.
    if rows * cols * itemsize >= 2 * _TARGET_BLOCK_BYTES:
        rows_per_step = -(-rows // _MIN_GRID_STEPS)    # ceil
        cap = -(-rows_per_step // sub) * sub           # round up to sublane mult
        tm = min(tm, max(sub, cap))

    # Don't exceed (rounded-up) total rows.
    tm = min(tm, -(-rows // sub) * sub)

    grid = (pl.cdiv(rows, tm),)
    beta_smem = jnp.asarray(beta, jnp.float32).reshape(1, 1)

    out = pl.pallas_call(
        _shifted_softplus_kernel,
        out_shape=jax.ShapeDtypeStruct((rows, cols), dtype),
        grid=grid,
        in_specs=[
            pl.BlockSpec(memory_space=pltpu.MemorySpace.SMEM),   # beta scalar
            pl.BlockSpec((tm, cols), lambda i: (i, 0)),          # x tile
        ],
        out_specs=pl.BlockSpec((tm, cols), lambda i: (i, 0)),
        compiler_params=pltpu.CompilerParams(
            dimension_semantics=("parallel",),       # shards across v7x's 2 TCs
            vmem_limit_bytes=_VMEM_LIMIT,
        ),
    )(beta_smem, x2d)

    if padded:
        return out.reshape(-1)[:total].reshape(orig_shape)
    return out.reshape(orig_shape)


def _reference(x, beta):
    z = jnp.asarray(beta, jnp.float32) * x.astype(jnp.float32)
    return (jnp.logaddexp(z, 0.0) - _SHIFT).astype(x.dtype)


if __name__ == "__main__":
    key = jax.random.PRNGKey(0)
    # deterministic parameter init, matching nn.Parameter(torch.tensor(1.0))
    beta = jnp.float32(1.0)

    k1, k2, k3 = jax.random.split(key, 3)

    # 1) canonical SchNet feature tensor, f32 -> fast path A (last dim % 128 == 0)
    x1 = jax.random.normal(k1, (16, 128), dtype=jnp.float32) * 3.0
    y1 = shifted_softplus(x1, beta)
    jax.block_until_ready(y1)
    assert y1.shape == x1.shape and y1.dtype == x1.dtype
    assert jnp.max(jnp.abs(y1 - _reference(x1, beta))) < 1e-5

    # 2) awkward shape, f32 -> ragged fallback (pad + slice)
    x2 = jax.random.normal(k2, (37, 193), dtype=jnp.float32) * 2.0
    y2 = shifted_softplus(x2, beta)
    jax.block_until_ready(y2)
    assert y2.shape == x2.shape and y2.dtype == x2.dtype
    assert jnp.max(jnp.abs(y2 - _reference(x2, beta))) < 1e-5

    # 3) bfloat16 input, total divisible by 512 -> fast path B (flat slab)
    x3 = (jax.random.normal(k3, (64, 96), dtype=jnp.float32) * 3.0).astype(jnp.bfloat16)
    y3 = shifted_softplus(x3, beta)
    jax.block_until_ready(y3)
    assert y3.shape == x3.shape and y3.dtype == x3.dtype
    err3 = jnp.max(jnp.abs(y3.astype(jnp.float32) -
                           _reference(x3, beta).astype(jnp.float32)))
    assert err3 < 2e-2

    print("KERNEL_OK")
</pallas_src>

<mosaic_0001>
module attributes {stable_mosaic.version = 11 : i64} {
  func.func @_shifted_softplus_kernel(%arg0: i32, %arg1: memref<1x1xf32, #tpu.memory_space<smem>>, %arg2: memref<16x128xf32, #tpu.memory_space<vmem>>, %arg3: memref<16x128xf32, #tpu.memory_space<vmem>>) attributes {dimension_semantics = [#tpu.dimension_semantics<parallel>], iteration_bounds = array<i64: 1>, scalar_prefetch = 0 : i64, scratch_operands = 0 : i64, tpu.core_type = #tpu.core_type<tc>, window_params = [{transform_indices = @transform_0, window_bounds = array<i64: 1, 1>}, {transform_indices = @transform_1, window_bounds = array<i64: 16, 128>}, {transform_indices = @transform_2, window_bounds = array<i64: 16, 128>}]} {
    %c0 = arith.constant 0 : index
    %c0_0 = arith.constant 0 : index
    %0 = memref.load %arg1[%c0, %c0_0] : memref<1x1xf32, #tpu.memory_space<smem>>
    %c0_1 = arith.constant 0 : index
    %c0_2 = arith.constant 0 : index
    %1 = vector.load %arg2[%c0_1, %c0_2] : memref<16x128xf32, #tpu.memory_space<vmem>>, vector<16x128xf32>
    %2 = vector.broadcast %0 : f32 to vector<16x128xf32>
    %3 = arith.mulf %2, %1 : vector<16x128xf32>
    %cst = arith.constant 0.000000e+00 : f32
    %4 = vector.broadcast %cst : f32 to vector<16x128xf32>
    %5 = arith.maximumf %3, %4 : vector<16x128xf32>
    %6 = math.absf %3 : vector<16x128xf32>
    %cst_3 = arith.constant 0.000000e+00 : f32
    %7 = vector.broadcast %cst_3 : f32 to vector<16x128xf32>
    %8 = arith.subf %7, %6 : vector<16x128xf32>
    %9 = math.exp %8 : vector<16x128xf32>
    %10 = math.log1p %9 : vector<16x128xf32>
    %11 = arith.addf %5, %10 : vector<16x128xf32>
    %cst_4 = arith.constant 0.693147182 : f32
    %12 = vector.broadcast %cst_4 : f32 to vector<16x128xf32>
    %13 = arith.subf %11, %12 : vector<16x128xf32>
    %c0_5 = arith.constant 0 : index
    %c0_6 = arith.constant 0 : index
    %14 = vector.load %arg3[%c0_5, %c0_6] : memref<16x128xf32, #tpu.memory_space<vmem>>, vector<16x128xf32>
    tpu.vector_store %arg3[%c0_5, %c0_6], %13 {strides = array<i32>} : memref<16x128xf32, #tpu.memory_space<vmem>>, vector<16x128xf32>,
    return
  }
  func.func @transform_0(%arg0: i32) -> (i32, i32) {
    %c0_i32 = arith.constant 0 : i32
    %c0_i32_0 = arith.constant 0 : i32
    %c0_i32_1 = arith.constant 0 : i32
    return %c0_i32, %c0_i32_0 : i32, i32
  }
  func.func @transform_1(%arg0: i32) -> (i32, i32) {
    %c0_i32 = arith.constant 0 : i32
    %c0_i32_0 = arith.constant 0 : i32
    return %arg0, %c0_i32 : i32, i32
  }
  func.func @transform_2(%arg0: i32) -> (i32, i32) {
    %c0_i32 = arith.constant 0 : i32
    %c0_i32_0 = arith.constant 0 : i32
    return %arg0, %c0_i32 : i32, i32
  }
}

</mosaic_0001>

<llo_original>
// kernel: tpu_custom_call.1
$region0: #{tpu_custom_call.1}
  #allocation0 [shape = 'u32[]', space=smem, size = 0x4, offset = 0x4, fixed_abs, tag = 'smem constant byte address 0x4 - core index']
  #allocation1 [shape = 'u32[144,128]{1,0:T(1,128)}', space=vmem, size = 0x12000, scoped, tag = 'internal scratch']
  #allocation2 [shape = 'f32[1,1]{1,0:T(1,128)S(6)}', space=smem, size = 0x200, scoped, tag = 'scoped memory for tpu_custom_call.1']
  %s0 = inlined_call_operand.<no memory space> [shape: f32[1,1], index: 0, kind: input, shape index: {}]
  %s1 = inlined_call_operand.hbm [shape: f32[16,128], index: 1, kind: input, shape index: {}]
  %s2 = inlined_call_operand.hbm [shape: f32[16,128], index: 2, kind: output, shape index: {}]
  %s3 = sld [smem:[#allocation0]]
  $region22: #{tpu_custom_call.1} parent=0
    _
  %s5 = ssub.s32 1, %s3
  %s6 = scalar_select 0, %s5, %s3
  %7 = sst [smem:[#allocation2]] %s0
  $region1: #{tpu_custom_call.1} parent=0
    #allocation3 [shape = 'u8[8192]{0}', space=vmem, size = 0x2000, scoped, tag = 'input window, operand 1, single buffered']
    #allocation4 [shape = 's32[1]{0}', space=sflag, size = 0x4, scoped, tag = 'scoped memory for tpu_custom_call.1']
    #allocation5 [shape = 's32[1]{0}', space=sflag, size = 0x4, scoped, tag = 'scoped memory for tpu_custom_call.1']
    #allocation6 [shape = 'u8[8192]{0}', space=vmem, size = 0x2000, scoped, tag = 'output window, operand 0, single buffered']
    %8 = vsyncpa [#allocation4], 0
    %9 = vsyncpa [#allocation5], 0
    // Predicated region
    $region2: #{tpu_custom_call.1} parent=1 // pred_check
      _
    $region3: #{tpu_custom_call.1} parent=1 // pred_check_branch
      %11 = sbr.rel (0) target = $region5
    $region4: #{tpu_custom_call.1} parent=1 // pred_region
      _
    $region5: #{tpu_custom_call.1} parent=1 // pred_fallthru
      _
    // Predicated region
    $region6: #{tpu_custom_call.1} parent=1 // pred_check
      _
    $region7: #{tpu_custom_call.1} parent=1 // pred_check_branch
      %13 = sbr.rel (0) target = $region9
    $region8: #{tpu_custom_call.1} parent=1 // pred_region
      %s15 = ssub.s32 256, 256
      %16 = vsyncadd [#allocation4], %s15
      %s17 = sshll.u32 [#allocation3], 4
      %s18 = int_to_ptr.vmem [resolvable:$true] %s17
      %23 = dma.hbm_to_vmem [thread:$0]  %s1, 256, %s18, [#allocation4], 128, 128, 8
    $region9: #{tpu_custom_call.1} parent=1 // pred_fallthru
      _
    // Predicated region
    $region10: #{tpu_custom_call.1} parent=1 // pred_check
      _
    $region11: #{tpu_custom_call.1} parent=1 // pred_check_branch
      %25 = sbr.rel (0) target = $region13
    $region12: #{tpu_custom_call.1} parent=1 // pred_region
      %26 = dma.done [#allocation4], 256
    $region13: #{tpu_custom_call.1} parent=1 // pred_fallthru
      _
    %s27 = sld [smem:[#allocation2]]
    %v28 = vld [vmem:[#allocation3] sm:$0xff]
    %v29 = vld [vmem:[#allocation3 + $0x8] sm:$0xff]
    %v30 = vstv %s27
    %v31 = vmul.f32 %v30, %v28
    %v32 = vmul.f32 %v30, %v29
    %v33 = vmax.f32 %v31, 0.0
    %v34 = vmax.f32 %v32, 0.0
    %v35 = vand.u32 2147483647, %v31
    %v36 = vand.u32 2147483647, %v32
    %v37 = vsub.f32 0.0, %v35
    %v38 = vsub.f32 0.0, %v36
    %v39 = vmul.f32 %v37, 1.442695
    %v40 = vpow.pop %v39
    %v41 = vmul.f32 %v38, 1.442695
    %v42 = vpow.pop %v41
    %v43 = vadd.f32 %v40, 1.0
    %v44 = vlog2.pop %v43
    %v45 = vmul.f32 %v44, 0.6931472
    %v46 = vmul.f32 -0.5, %v40
    %v47 = vadd.f32 %v46, 1.0
    %v48 = vmul.f32 %v47, %v40
    %v49 = vand.u32 2147483647, %v40
    %vm50 = vcmp.lt.f32.partialorder %v49, 0.0004427343
    %v51 = vsel %vm50, %v48, %v45
    %v52 = vadd.f32 %v42, 1.0
    %v53 = vlog2.pop %v52
    %v54 = vmul.f32 %v53, 0.6931472
    %v55 = vmul.f32 -0.5, %v42
    %v56 = vadd.f32 %v55, 1.0
    %v57 = vmul.f32 %v56, %v42
    %v58 = vand.u32 2147483647, %v42
    %vm59 = vcmp.lt.f32.partialorder %v58, 0.0004427343
    %v60 = vsel %vm59, %v57, %v54
    %v61 = vadd.f32 %v33, %v51
    %v62 = vadd.f32 %v34, %v60
    %v63 = vsub.f32 %v61, 0.6931472
    %v64 = vsub.f32 %v62, 0.6931472
    %65 = vst [vmem:[#allocation6] sm:$0xff] %v63
    %66 = vst [vmem:[#allocation6 + $0x8] sm:$0xff] %v64
    // Predicated region
    $region14: #{tpu_custom_call.1} parent=1 // pred_check
      _
    $region15: #{tpu_custom_call.1} parent=1 // pred_check_branch
      %68 = sbr.rel (0) target = $region17
    $region16: #{tpu_custom_call.1} parent=1 // pred_region
      %s70 = ssub.s32 256, 256
      %71 = vsyncadd [#allocation5], %s70
      %s72 = sshll.u32 [#allocation6], 4
      %s73 = int_to_ptr.vmem [resolvable:$true] %s72
      %78 = dma.vmem_to_hbm [thread:$0]  %s73, 256, %s2, [#allocation5], 128, 128, 8
    $region17: #{tpu_custom_call.1} parent=1 // pred_fallthru
      _
    // Predicated region
    $region18: #{tpu_custom_call.1} parent=1 // pred_check
      _
    $region19: #{tpu_custom_call.1} parent=1 // pred_check_branch
      %80 = sbr.rel (0) target = $region21
    $region20: #{tpu_custom_call.1} parent=1 // pred_region
      %81 = dma.done [#allocation5], 256
    $region21: #{tpu_custom_call.1} parent=1 // pred_fallthru
      _
    %82 = vsyncpa [#allocation4], 1
    %83 = vsyncpa [#allocation5], 1

</llo_original>
